<compile_context>
chip_gen: v7x
topology: tpu7x:2x2x1
jax: 0.10.0
libtpu: 0.0.40
codegen_flags: <defaults>
</compile_context>

<pallas_src>
import jax
import jax.numpy as jnp
from jax import lax
from jax.experimental import pallas as pl
from jax.experimental.pallas import tpu as pltpu

EPS = 1e-5


def _round_up(x, m):
    return ((x + m - 1) // m) * m


def mlp_kernel(x_ref, w_ref, b_ref, gamma_ref, beta_ref, o_ref, acc_ref):
    # grid = (N tiles, K tiles); K (reduction) is the last / innermost axis.
    k = pl.program_id(1)

    @pl.when(k == 0)
    def _():
        # Fuse the bias add into the accumulator init (saves a full VPU pass later).
        acc_ref[...] = jnp.broadcast_to(b_ref[...], acc_ref.shape).astype(jnp.float32)

    # x block: (B, TK); w block: (TN, TK). Contract the last dims of both so the
    # weight never needs a transposed copy in HBM. f32 accumulation on the MXU.
    acc_ref[...] += lax.dot_general(
        x_ref[...],
        w_ref[...],
        dimension_numbers=(((1,), (1,)), ((), ())),
        preferred_element_type=jnp.float32,
    )

    @pl.when(k == pl.num_programs(1) - 1)
    def _():
        # Epilogue: ReLU + BatchNorm1d (training mode) over the batch axis.
        h = jnp.maximum(acc_ref[...], 0.0)
        inv_b = 1.0 / h.shape[0]
        # One-pass batch stats: mean and E[h^2]; var = E[h^2] - mean^2 (f32, post-ReLU).
        mean = jnp.sum(h, axis=0, keepdims=True) * inv_b
        mean_sq = jnp.sum(h * h, axis=0, keepdims=True) * inv_b
        var = mean_sq - mean * mean
        inv_std = lax.rsqrt(var + EPS)
        y = (h - mean) * (inv_std * gamma_ref[...]) + beta_ref[...]
        o_ref[...] = y.astype(o_ref.dtype)


def mlp_forward(x, weight, bias, gamma, beta):
    """x: (B, D_in) f32; weight: (D_out, D_in); bias/gamma/beta: (D_out,)."""
    B, D_in = x.shape
    D_out = weight.shape[0]

    # Lane-dense tile sizes (multiples of 128). TK up to 512 to amortize MXU issue,
    # TN up to 256 to match the 2x256 MXU on v6e/v7x. Sized well under v7x's 64 MiB
    # VMEM for the double-buffered inputs + resident (B, TN) f32 accumulator.
    tk = 512 if D_in >= 512 else _round_up(D_in, 128)
    tn = 256 if D_out >= 256 else _round_up(D_out, 128)
    d_in_p = _round_up(D_in, tk)
    d_out_p = _round_up(D_out, tn)

    # Zero-pad feature dims (padded K columns contribute 0 to the dot; padded N
    # columns produce 0 outputs and are sliced off below). Batch is never padded
    # or tiled, so BatchNorm statistics stay exact.
    x_p = jnp.pad(x, ((0, 0), (0, d_in_p - D_in))) if d_in_p != D_in else x
    w_p = jnp.pad(weight, ((0, d_out_p - D_out), (0, d_in_p - D_in)))
    b_p = jnp.pad(bias, (0, d_out_p - D_out)).reshape(1, d_out_p)
    g_p = jnp.pad(gamma, (0, d_out_p - D_out)).reshape(1, d_out_p)
    be_p = jnp.pad(beta, (0, d_out_p - D_out)).reshape(1, d_out_p)

    grid = (d_out_p // tn, d_in_p // tk)

    out_p = pl.pallas_call(
        mlp_kernel,
        out_shape=jax.ShapeDtypeStruct((B, d_out_p), x.dtype),
        grid_spec=pltpu.PrefetchScalarGridSpec(
            num_scalar_prefetch=0,
            grid=grid,
            in_specs=[
                pl.BlockSpec((B, tk), lambda j, k: (0, k)),      # x
                pl.BlockSpec((tn, tk), lambda j, k: (j, k)),     # weight (D_out, D_in)
                pl.BlockSpec((1, tn), lambda j, k: (0, j)),      # bias
                pl.BlockSpec((1, tn), lambda j, k: (0, j)),      # gamma
                pl.BlockSpec((1, tn), lambda j, k: (0, j)),      # beta
            ],
            out_specs=pl.BlockSpec((B, tn), lambda j, k: (0, j)),
            scratch_shapes=[pltpu.VMEM((B, tn), jnp.float32)],
        ),
        compiler_params=pltpu.CompilerParams(
            # N tiles are independent (megacore-parallel on v7x); K is the reduction.
            dimension_semantics=("parallel", "arbitrary"),
        ),
    )(x_p, w_p, b_p, g_p, be_p)

    return out_p[:, :D_out] if d_out_p != D_out else out_p


def mlp_reference(x, weight, bias, gamma, beta):
    h = jnp.maximum(x @ weight.T + bias, 0.0)
    mean = jnp.mean(h, axis=0, keepdims=True)
    var = jnp.mean((h - mean) ** 2, axis=0, keepdims=True)
    return (h - mean) / jnp.sqrt(var + EPS) * gamma + beta


if __name__ == "__main__":
    B, D_in, D_out = 8, 32, 16

    key = jax.random.PRNGKey(0)
    kx, kw, kb = jax.random.split(key, 3)

    x = jax.random.normal(kx, (B, D_in), dtype=jnp.float32)
    # Shapes match nn.Linear(D_in, D_out) + BatchNorm1d(D_out)
    bound = 1.0 / (D_in ** 0.5)
    weight = jax.random.uniform(kw, (D_out, D_in), jnp.float32, -bound, bound)
    bias = jax.random.uniform(kb, (D_out,), jnp.float32, -bound, bound)
    gamma = jnp.ones((D_out,), jnp.float32)   # BatchNorm1d default affine init
    beta = jnp.zeros((D_out,), jnp.float32)

    out = mlp_forward(x, weight, bias, gamma, beta)
    out = jax.block_until_ready(out)

    ref = mlp_reference(x, weight, bias, gamma, beta)
    assert out.shape == ref.shape, f"shape mismatch {out.shape} vs {ref.shape}"
    assert jnp.allclose(out, ref, atol=1e-5, rtol=1e-5), "mismatch vs reference"

    print("KERNEL_OK")
</pallas_src>

<mosaic_0001>
module attributes {stable_mosaic.version = 11 : i64} {
  func.func @mlp_kernel(%arg0: i32, %arg1: i32, %arg2: memref<8x128xf32, #tpu.memory_space<vmem>>, %arg3: memref<128x128xf32, #tpu.memory_space<vmem>>, %arg4: memref<1x128xf32, #tpu.memory_space<vmem>>, %arg5: memref<1x128xf32, #tpu.memory_space<vmem>>, %arg6: memref<1x128xf32, #tpu.memory_space<vmem>>, %arg7: memref<8x128xf32, #tpu.memory_space<vmem>>, %arg8: memref<8x128xf32, #tpu.memory_space<vmem>>) attributes {dimension_semantics = [#tpu.dimension_semantics<parallel>, #tpu.dimension_semantics<arbitrary>], iteration_bounds = array<i64: 1, 1>, scalar_prefetch = 0 : i64, scratch_operands = 1 : i64, tpu.core_type = #tpu.core_type<tc>, window_params = [{transform_indices = @transform_0, window_bounds = array<i64: 8, 128>}, {transform_indices = @transform_1, window_bounds = array<i64: 128, 128>}, {transform_indices = @transform_2, window_bounds = array<i64: 1, 128>}, {transform_indices = @transform_3, window_bounds = array<i64: 1, 128>}, {transform_indices = @transform_4, window_bounds = array<i64: 1, 128>}, {transform_indices = @transform_5, window_bounds = array<i64: 8, 128>}]} {
    %c0_i32 = arith.constant 0 : i32
    %0 = arith.cmpi eq, %arg1, %c0_i32 : i32
    %1 = arith.extui %0 : i1 to i32
    %c0_i32_0 = arith.constant 0 : i32
    %2 = arith.cmpi ne, %1, %c0_i32_0 : i32
    scf.if %2 {
      %c0_10 = arith.constant 0 : index
      %c0_11 = arith.constant 0 : index
      %12 = vector.load %arg4[%c0_10, %c0_11] : memref<1x128xf32, #tpu.memory_space<vmem>>, vector<1x128xf32>
      %13 = vector.shape_cast %12 : vector<1x128xf32> to vector<1x128xf32>
      %14 = vector.broadcast %13 : vector<1x128xf32> to vector<8x128xf32>
      %c0_12 = arith.constant 0 : index
      %c0_13 = arith.constant 0 : index
      %15 = vector.load %arg8[%c0_12, %c0_13] : memref<8x128xf32, #tpu.memory_space<vmem>>, vector<8x128xf32>
      tpu.vector_store %arg8[%c0_12, %c0_13], %14 {strides = array<i32>} : memref<8x128xf32, #tpu.memory_space<vmem>>, vector<8x128xf32>,
    } else {
    }
    %c0 = arith.constant 0 : index
    %c0_1 = arith.constant 0 : index
    %3 = vector.load %arg8[%c0, %c0_1] : memref<8x128xf32, #tpu.memory_space<vmem>>, vector<8x128xf32>
    %c0_2 = arith.constant 0 : index
    %c0_3 = arith.constant 0 : index
    %4 = vector.load %arg2[%c0_2, %c0_3] : memref<8x128xf32, #tpu.memory_space<vmem>>, vector<8x128xf32>
    %c0_4 = arith.constant 0 : index
    %c0_5 = arith.constant 0 : index
    %5 = vector.load %arg3[%c0_4, %c0_5] : memref<128x128xf32, #tpu.memory_space<vmem>>, vector<128x128xf32>
    %cst = arith.constant dense<0.000000e+00> : vector<8x128xf32>
    %6 = tpu.matmul %4, %5, %cst {dimension_numbers = #tpu.dot_dimension_numbers<[1], [1], [0], [0], [0, 0, 1, 0], [], []>} : vector<8x128xf32>, vector<128x128xf32>, vector<8x128xf32> -> vector<8x128xf32>
    %7 = arith.addf %3, %6 : vector<8x128xf32>
    %c0_6 = arith.constant 0 : index
    %c0_7 = arith.constant 0 : index
    %8 = vector.load %arg8[%c0_6, %c0_7] : memref<8x128xf32, #tpu.memory_space<vmem>>, vector<8x128xf32>
    tpu.vector_store %arg8[%c0_6, %c0_7], %7 {strides = array<i32>} : memref<8x128xf32, #tpu.memory_space<vmem>>, vector<8x128xf32>,
    %c0_i32_8 = arith.constant 0 : i32
    %9 = arith.cmpi eq, %arg1, %c0_i32_8 : i32
    %10 = arith.extui %9 : i1 to i32
    %c0_i32_9 = arith.constant 0 : i32
    %11 = arith.cmpi ne, %10, %c0_i32_9 : i32
    scf.if %11 {
      %c0_10 = arith.constant 0 : index
      %c0_11 = arith.constant 0 : index
      %12 = vector.load %arg8[%c0_10, %c0_11] : memref<8x128xf32, #tpu.memory_space<vmem>>, vector<8x128xf32>
      %cst_12 = arith.constant 0.000000e+00 : f32
      %13 = vector.broadcast %cst_12 : f32 to vector<8x128xf32>
      %14 = arith.maximumf %12, %13 : vector<8x128xf32>
      %cst_13 = arith.constant dense<0.000000e+00> : vector<128xf32>
      %15 = vector.multi_reduction <add>, %14, %cst_13 [0] : vector<8x128xf32> to vector<128xf32>
      %16 = vector.shape_cast %15 : vector<128xf32> to vector<1x128xf32>
      %cst_14 = arith.constant 1.250000e-01 : f32
      %17 = vector.broadcast %cst_14 : f32 to vector<1x128xf32>
      %18 = arith.mulf %16, %17 : vector<1x128xf32>
      %19 = arith.mulf %14, %14 : vector<8x128xf32>
      %cst_15 = arith.constant dense<0.000000e+00> : vector<128xf32>
      %20 = vector.multi_reduction <add>, %19, %cst_15 [0] : vector<8x128xf32> to vector<128xf32>
      %21 = vector.shape_cast %20 : vector<128xf32> to vector<1x128xf32>
      %cst_16 = arith.constant 1.250000e-01 : f32
      %22 = vector.broadcast %cst_16 : f32 to vector<1x128xf32>
      %23 = arith.mulf %21, %22 : vector<1x128xf32>
      %24 = arith.mulf %18, %18 : vector<1x128xf32>
      %25 = arith.subf %23, %24 : vector<1x128xf32>
      %cst_17 = arith.constant 9.99999974E-6 : f32
      %26 = vector.broadcast %cst_17 : f32 to vector<1x128xf32>
      %27 = arith.addf %25, %26 : vector<1x128xf32>
      %28 = math.rsqrt %27 : vector<1x128xf32>
      %29 = vector.broadcast %18 : vector<1x128xf32> to vector<8x128xf32>
      %30 = arith.subf %14, %29 : vector<8x128xf32>
      %c0_18 = arith.constant 0 : index
      %c0_19 = arith.constant 0 : index
      %31 = vector.load %arg5[%c0_18, %c0_19] : memref<1x128xf32, #tpu.memory_space<vmem>>, vector<1x128xf32>
      %32 = arith.mulf %28, %31 : vector<1x128xf32>
      %33 = vector.broadcast %32 : vector<1x128xf32> to vector<8x128xf32>
      %34 = arith.mulf %30, %33 : vector<8x128xf32>
      %c0_20 = arith.constant 0 : index
      %c0_21 = arith.constant 0 : index
      %35 = vector.load %arg6[%c0_20, %c0_21] : memref<1x128xf32, #tpu.memory_space<vmem>>, vector<1x128xf32>
      %36 = vector.broadcast %35 : vector<1x128xf32> to vector<8x128xf32>
      %37 = arith.addf %34, %36 : vector<8x128xf32>
      %c0_22 = arith.constant 0 : index
      %c0_23 = arith.constant 0 : index
      %38 = vector.load %arg7[%c0_22, %c0_23] : memref<8x128xf32, #tpu.memory_space<vmem>>, vector<8x128xf32>
      tpu.vector_store %arg7[%c0_22, %c0_23], %37 {strides = array<i32>} : memref<8x128xf32, #tpu.memory_space<vmem>>, vector<8x128xf32>,
    } else {
    }
    return
  }
  func.func @transform_0(%arg0: i32, %arg1: i32) -> (i32, i32) {
    %c0_i32 = arith.constant 0 : i32
    %c0_i32_0 = arith.constant 0 : i32
    return %c0_i32, %arg1 : i32, i32
  }
  func.func @transform_1(%arg0: i32, %arg1: i32) -> (i32, i32) {
    %c0_i32 = arith.constant 0 : i32
    return %arg0, %arg1 : i32, i32
  }
  func.func @transform_2(%arg0: i32, %arg1: i32) -> (i32, i32) {
    %c0_i32 = arith.constant 0 : i32
    %c0_i32_0 = arith.constant 0 : i32
    return %c0_i32, %arg0 : i32, i32
  }
  func.func @transform_3(%arg0: i32, %arg1: i32) -> (i32, i32) {
    %c0_i32 = arith.constant 0 : i32
    %c0_i32_0 = arith.constant 0 : i32
    return %c0_i32, %arg0 : i32, i32
  }
  func.func @transform_4(%arg0: i32, %arg1: i32) -> (i32, i32) {
    %c0_i32 = arith.constant 0 : i32
    %c0_i32_0 = arith.constant 0 : i32
    return %c0_i32, %arg0 : i32, i32
  }
  func.func @transform_5(%arg0: i32, %arg1: i32) -> (i32, i32) {
    %c0_i32 = arith.constant 0 : i32
    %c0_i32_0 = arith.constant 0 : i32
    return %c0_i32, %arg0 : i32, i32
  }
}

</mosaic_0001>

<llo_original>
// kernel: tpu_custom_call.1
$region0: #{tpu_custom_call.1}
  #allocation0 [shape = 'u32[]', space=smem, size = 0x4, offset = 0x4, fixed_abs, tag = 'smem constant byte address 0x4 - core index']
  #allocation1 [shape = 'u32[144,128]{1,0:T(1,128)}', space=vmem, size = 0x12000, scoped, tag = 'internal scratch']
  #allocation2 [shape = 'f32[8,128]{1,0:T(8,128)}', space=vmem, size = 0x1000, scoped, tag = 'scratch operand']
  %s0 = inlined_call_operand.hbm [shape: f32[8,128], index: 0, kind: input, shape index: {}]
  %s1 = inlined_call_operand.hbm [shape: f32[128,128], index: 1, kind: input, shape index: {}]
  %s2 = inlined_call_operand.vmem [shape: f32[1,128], index: 2, kind: input, shape index: {}]
  %s3 = inlined_call_operand.vmem [shape: f32[1,128], index: 3, kind: input, shape index: {}]
  %s4 = inlined_call_operand.vmem [shape: f32[1,128], index: 4, kind: input, shape index: {}]
  %s5 = inlined_call_operand.hbm [shape: f32[8,128], index: 5, kind: output, shape index: {}]
  %s6 = sld [smem:[#allocation0]]
  $region46: #{tpu_custom_call.1} parent=0
    _
  %s8 = ssub.s32 1, %s6
  %s9 = scalar_select 0, %s8, %s6
  $region1: #{tpu_custom_call.1} parent=0
    #allocation3 [shape = 'u8[4096]{0}', space=vmem, size = 0x1000, scoped, tag = 'input window, operand 0, single buffered']
    #allocation4 [shape = 's32[1]{0}', space=sflag, size = 0x4, scoped, tag = 'scoped memory for tpu_custom_call.1']
    #allocation5 [shape = 's32[1]{0}', space=sflag, size = 0x4, scoped, tag = 'scoped memory for tpu_custom_call.1']
    #allocation6 [shape = 'u8[65536]{0}', space=vmem, size = 0x10000, scoped, tag = 'input window, operand 1, single buffered']
    #allocation7 [shape = 's32[1]{0}', space=sflag, size = 0x4, scoped, tag = 'scoped memory for tpu_custom_call.1']
    #allocation8 [shape = 'u8[4096]{0}', space=vmem, size = 0x1000, scoped, tag = 'output window, operand 0, single buffered']
    %10 = vsyncpa [#allocation4], 0
    %11 = vsyncpa [#allocation7], 0
    %12 = vsyncpa [#allocation5], 0
    // Predicated region
    $region2: #{tpu_custom_call.1} parent=1 // pred_check
      _
    $region3: #{tpu_custom_call.1} parent=1 // pred_check_branch
      %14 = sbr.rel (0) target = $region5
    $region4: #{tpu_custom_call.1} parent=1 // pred_region
      %s16 = ssub.s32 128, 128
      %17 = vsyncadd [#allocation4], %s16
      %s19 = sshll.u32 [#allocation3], 4
      %s20 = int_to_ptr.vmem [resolvable:$true] %s19
      %22 = dma.hbm_to_vmem [thread:$0]  %s0, 128, %s20, [#allocation4]
    $region5: #{tpu_custom_call.1} parent=1 // pred_fallthru
      _
    // Predicated region
    $region6: #{tpu_custom_call.1} parent=1 // pred_check
      _
    $region7: #{tpu_custom_call.1} parent=1 // pred_check_branch
      %24 = sbr.rel (0) target = $region9
    $region8: #{tpu_custom_call.1} parent=1 // pred_region
      %s26 = ssub.s32 2048, 2048
      %27 = vsyncadd [#allocation7], %s26
      %s28 = sshll.u32 [#allocation6], 4
      %s29 = int_to_ptr.vmem [resolvable:$true] %s28
      %34 = dma.hbm_to_vmem [thread:$0]  %s1, 2048, %s29, [#allocation7], 128, 128, 8
    $region9: #{tpu_custom_call.1} parent=1 // pred_fallthru
      _
    // Predicated region
    $region10: #{tpu_custom_call.1} parent=1 // pred_check
      _
    $region11: #{tpu_custom_call.1} parent=1 // pred_check_branch
      %36 = sbr.rel (0) target = $region13
    $region12: #{tpu_custom_call.1} parent=1 // pred_region
      _
    $region13: #{tpu_custom_call.1} parent=1 // pred_fallthru
      _
    // Predicated region
    $region14: #{tpu_custom_call.1} parent=1 // pred_check
      _
    $region15: #{tpu_custom_call.1} parent=1 // pred_check_branch
      %38 = sbr.rel (0) target = $region17
    $region16: #{tpu_custom_call.1} parent=1 // pred_region
      _
    $region17: #{tpu_custom_call.1} parent=1 // pred_fallthru
      _
    // Predicated region
    $region18: #{tpu_custom_call.1} parent=1 // pred_check
      _
    $region19: #{tpu_custom_call.1} parent=1 // pred_check_branch
      %40 = sbr.rel (0) target = $region21
    $region20: #{tpu_custom_call.1} parent=1 // pred_region
      _
    $region21: #{tpu_custom_call.1} parent=1 // pred_fallthru
      _
    // Predicated region
    $region22: #{tpu_custom_call.1} parent=1 // pred_check
      _
    $region23: #{tpu_custom_call.1} parent=1 // pred_check_branch
      %42 = sbr.rel (0) target = $region25
    $region24: #{tpu_custom_call.1} parent=1 // pred_region
      %43 = dma.done [#allocation4], 128
    $region25: #{tpu_custom_call.1} parent=1 // pred_fallthru
      _
    // Predicated region
    $region26: #{tpu_custom_call.1} parent=1 // pred_check
      _
    $region27: #{tpu_custom_call.1} parent=1 // pred_check_branch
      %45 = sbr.rel (0) target = $region29
    $region28: #{tpu_custom_call.1} parent=1 // pred_region
      %46 = dma.done [#allocation7], 2048
    $region29: #{tpu_custom_call.1} parent=1 // pred_fallthru
      _
    %p47 = scmp.eq.s32.totalorder 0, 0
    // Predicated region
    $region30: #{tpu_custom_call.1} parent=1 // pred_check
      %p48 = pneg %p47
    $region31: #{tpu_custom_call.1} parent=1 // pred_check_branch
      %50 = sbr.rel (%p48) target = $region33
    $region32: #{tpu_custom_call.1} parent=1 // pred_region
      %v51 = vld [vmem:[%s2] sm:$0x1]
      %v53 = vlaneseq
      %v54 = vshrl.u32 %v53, 7
      %v55 = vsub.s32 0, %v54
      %v56 = vrot.slane %v51, %v55
      %58 = vst [vmem:[#allocation2] sm:$0xff] %v56
    $region33: #{tpu_custom_call.1} parent=1 // pred_fallthru
      _
    %v59 = vld [vmem:[#allocation2] sm:$0xff]
    %v60 = vld [vmem:[#allocation3] sm:$0xff]
    %v61 = vld [vmem:[#allocation6] sm:$0xff]
    %v62 = vld [vmem:[#allocation6 + $0x8] sm:$0xff]
    %v63 = vld [vmem:[#allocation6 + $0x10] sm:$0xff]
    %v64 = vld [vmem:[#allocation6 + $0x18] sm:$0xff]
    %v65 = vld [vmem:[#allocation6 + $0x20] sm:$0xff]
    %v66 = vld [vmem:[#allocation6 + $0x28] sm:$0xff]
    %v67 = vld [vmem:[#allocation6 + $0x30] sm:$0xff]
    %v68 = vld [vmem:[#allocation6 + $0x38] sm:$0xff]
    %v69 = vld [vmem:[#allocation6 + $0x40] sm:$0xff]
    %v70 = vld [vmem:[#allocation6 + $0x48] sm:$0xff]
    %v71 = vld [vmem:[#allocation6 + $0x50] sm:$0xff]
    %v72 = vld [vmem:[#allocation6 + $0x58] sm:$0xff]
    %v73 = vld [vmem:[#allocation6 + $0x60] sm:$0xff]
    %v74 = vld [vmem:[#allocation6 + $0x68] sm:$0xff]
    %v75 = vld [vmem:[#allocation6 + $0x70] sm:$0xff]
    %v76 = vld [vmem:[#allocation6 + $0x78] sm:$0xff]
    %77 = vmatprep.subr.mxu0 0.0
    %78 = vmatpush1.xpose.msra.mxu0 %v61
    %79 = vmatprep.subr.mxu0 0.0
    %80 = vmatpush1.xpose.msra.mxu0 %v62
    %81 = vmatprep.subr.mxu0 0.0
    %82 = vmatpush1.xpose.msra.mxu0 %v63
    %83 = vmatprep.subr.mxu0 0.0
    %84 = vmatpush1.xpose.msra.mxu0 %v64
    %85 = vmatprep.subr.mxu0 0.0
    %86 = vmatpush1.xpose.msra.mxu0 %v65
    %87 = vmatprep.subr.mxu0 0.0
    %88 = vmatpush1.xpose.msra.mxu0 %v66
    %89 = vmatprep.subr.mxu0 0.0
    %90 = vmatpush1.xpose.msra.mxu0 %v67
    %91 = vmatprep.subr.mxu0 0.0
    %92 = vmatpush1.xpose.msra.mxu0 %v68
    %93 = vmatprep.subr.mxu0 0.0
    %94 = vmatpush1.xpose.msra.mxu0 %v69
    %95 = vmatprep.subr.mxu0 0.0
    %96 = vmatpush1.xpose.msra.mxu0 %v70
    %97 = vmatprep.subr.mxu0 0.0
    %98 = vmatpush1.xpose.msra.mxu0 %v71
    %99 = vmatprep.subr.mxu0 0.0
    %100 = vmatpush1.xpose.msra.mxu0 %v72
    %101 = vmatprep.subr.mxu0 0.0
    %102 = vmatpush1.xpose.msra.mxu0 %v73
    %103 = vmatprep.subr.mxu0 0.0
    %104 = vmatpush1.xpose.msra.mxu0 %v74
    %105 = vmatprep.subr.mxu0 0.0
    %106 = vmatpush1.xpose.msra.mxu0 %v75
    %107 = vmatprep.subr.mxu0 0.0
    %108 = vmatpush1.xpose.msra.mxu0 %v76
    %109 = vmatprep.subr.mxu0 0.0
    %110 = vmatpush1.xpose.msra.mxu0 0.0
    %111 = vmatprep.subr.mxu0 0.0
    %112 = vmatpush1.xpose.msra.mxu0 0.0
    %113 = vmatprep.subr.mxu0 0.0
    %114 = vmatpush1.xpose.msra.mxu0 0.0
    %115 = vmatprep.subr.mxu0 0.0
    %116 = vmatpush1.xpose.msra.mxu0 0.0
    %117 = vmatprep.subr.mxu0 0.0
    %118 = vmatpush1.xpose.msra.mxu0 0.0
    %119 = vmatprep.subr.mxu0 0.0
    %120 = vmatpush1.xpose.msra.mxu0 0.0
    %121 = vmatprep.subr.mxu0 0.0
    %122 = vmatpush1.xpose.msra.mxu0 0.0
    %123 = vmatprep.subr.mxu0 0.0
    %124 = vmatpush1.xpose.msra.mxu0 0.0
    %125 = vmatprep.subr.mxu0 0.0
    %126 = vmatpush1.xpose.msra.mxu0 0.0
    %127 = vmatprep.subr.mxu0 0.0
    %128 = vmatpush1.xpose.msra.mxu0 0.0
    %129 = vmatprep.subr.mxu0 0.0
    %130 = vmatpush1.xpose.msra.mxu0 0.0
    %131 = vmatprep.subr.mxu0 0.0
    %132 = vmatpush1.xpose.msra.mxu0 0.0
    %133 = vmatprep.subr.mxu0 0.0
    %134 = vmatpush1.xpose.msra.mxu0 0.0
    %135 = vmatprep.subr.mxu0 0.0
    %136 = vmatpush1.xpose.msra.mxu0 0.0
    %137 = vmatprep.subr.mxu0 0.0
    %138 = vmatpush1.xpose.msra.mxu0 0.0
    %139 = vmatprep.subr.mxu0 0.0
    %140 = vmatpush1.xpose.msra.mxu0 0.0
    %141 = vmatprep.mubr.f32.mxu0 0.0
    %142 = vmatmul.mubr.f32.gmra.mrb[0].mxu0 %v60
    %v143 = vpop.f32.mrb[0].mxu0
    %v144 = vadd.f32 0.0, %v143
    %v145 = vpop.f32.mrb[0].mxu0
    %146 = vdwg.mxu0
    %v147 = vadd.f32 %v59, %v144
    %148 = vst [vmem:[#allocation2] sm:$0xff] %v147
    // Predicated region
    $region34: #{tpu_custom_call.1} parent=1 // pred_check
      %p149 = pneg %p47
    $region35: #{tpu_custom_call.1} parent=1 // pred_check_branch
      %151 = sbr.rel (%p149) target = $region37
    $region36: #{tpu_custom_call.1} parent=1 // pred_region
      %v152 = vld [vmem:[#allocation2] sm:$0xff]
      %v153 = vmax.f32 %v152, 0.0
      %v154 = vrot.slane %v153, 4
      %v155 = vadd.f32 %v153, %v154
      %v156 = vrot.slane %v155, 2
      %v157 = vadd.f32 %v155, %v156
      %v158 = vrot.slane %v157, 1
      %v159 = vadd.f32 %v157, %v158
      %v160 = vmul.f32 %v159, 0.125
      %v161 = vmul.f32 %v153, %v153
      %v162 = vrot.slane %v161, 4
      %v163 = vadd.f32 %v161, %v162
      %v164 = vrot.slane %v163, 2
      %v165 = vadd.f32 %v163, %v164
      %v166 = vrot.slane %v165, 1
      %v167 = vadd.f32 %v165, %v166
      %v168 = vmul.f32 %v167, 0.125
      %v169 = vmul.f32 %v160, %v160
      %v170 = vsub.f32 %v168, %v169
      %v171 = vadd.f32 %v170, 1e-05
      %v172 = vrsqrt.pop %v171
      %v173 = vsub.f32 %v153, %v160
      %v174 = vld [vmem:[%s3] sm:$0x1]
      %v175 = vmul.f32 %v172, %v174
      %v176 = vlaneseq
      %v177 = vshrl.u32 %v176, 7
      %v178 = vsub.s32 0, %v177
      %v179 = vrot.slane %v175, %v178
      %v180 = vmul.f32 %v173, %v179
      %v181 = vld [vmem:[%s4] sm:$0x1]
      %v183 = vlaneseq
      %v184 = vshrl.u32 %v183, 7
      %v185 = vsub.s32 0, %v184
      %v186 = vrot.slane %v181, %v185
      %v188 = vadd.f32 %v180, %v186
      %189 = vst [vmem:[#allocation8] sm:$0xff] %v188
    $region37: #{tpu_custom_call.1} parent=1 // pred_fallthru
      _
    // Predicated region
    $region38: #{tpu_custom_call.1} parent=1 // pred_check
      _
    $region39: #{tpu_custom_call.1} parent=1 // pred_check_branch
      %191 = sbr.rel (0) target = $region41
    $region40: #{tpu_custom_call.1} parent=1 // pred_region
      %s193 = ssub.s32 128, 128
      %194 = vsyncadd [#allocation5], %s193
      %s196 = sshll.u32 [#allocation8], 4
      %s197 = int_to_ptr.vmem [resolvable:$true] %s196
      %199 = dma.vmem_to_hbm [thread:$0]  %s197, 128, %s5, [#allocation5]
    $region41: #{tpu_custom_call.1} parent=1 // pred_fallthru
      _
    // Predicated region
    $region42: #{tpu_custom_call.1} parent=1 // pred_check
      _
    $region43: #{tpu_custom_call.1} parent=1 // pred_check_branch
      %201 = sbr.rel (0) target = $region45
    $region44: #{tpu_custom_call.1} parent=1 // pred_region
      %202 = dma.done [#allocation5], 128
    $region45: #{tpu_custom_call.1} parent=1 // pred_fallthru
      _
    %203 = vsyncpa [#allocation4], 1
    %204 = vsyncpa [#allocation7], 1
    %205 = vsyncpa [#allocation5], 1

</llo_original>
